<compile_context>
chip_gen: v5e
topology: v5e:2x2
jax: 0.10.0
libtpu: 0.0.40
codegen_flags: <defaults>
</compile_context>

<pallas_src>
import functools

import jax
import jax.numpy as jnp
from jax.experimental import pallas as pl
from jax.experimental.pallas import tpu as pltpu

_LANE = 128   # vreg lane width
_SUBLANE = 8  # f32 sublane count


def _round_up(n, m):
    return ((n + m - 1) // m) * m


def linear_net_kernel(x_ref, w1_ref, b1_ref, w2_ref, b2_ref, o_ref):
    # Fused: matmul -> bias -> ReLU -> matmul -> bias -> ReLU.
    x = x_ref[...]                                      # (Bp, in_size)
    h = jnp.dot(x, w1_ref[...],
                preferred_element_type=jnp.float32)     # (Bp, Hp) on MXU
    h = jnp.maximum(h + b1_ref[...], 0.0)               # bias + ReLU on VPU
    o = jnp.dot(h, w2_ref[...],
                preferred_element_type=jnp.float32)     # (Bp, Op) on MXU
    o = jnp.maximum(o + b2_ref[...], 0.0)
    o_ref[...] = o.astype(o_ref.dtype)                  # lane-dense full store


def prepare_params(w1, b1, w2, b2):
    """Pad weights/biases to lane-dense shapes ONCE (static across calls).

    Padded columns/rows are zero; combined with ReLU(0)=0 this makes the
    padding a numerical no-op (see module-level correctness note).
    """
    in_size, hidden_size = w1.shape
    out_size = w2.shape[1]
    Hp = _round_up(hidden_size, _LANE)
    Op = _round_up(out_size, _LANE)
    w1p = jnp.zeros((in_size, Hp), w1.dtype).at[:, :hidden_size].set(w1)
    b1p = jnp.zeros((1, Hp), b1.dtype).at[:, :hidden_size].set(b1)
    w2p = jnp.zeros((Hp, Op), w2.dtype).at[:hidden_size, :out_size].set(w2)
    b2p = jnp.zeros((1, Op), b2.dtype).at[:, :out_size].set(b2)
    return w1p, b1p, w2p, b2p


@functools.partial(jax.jit, static_argnames=("out_size",))
def linear_net(x, w1p, b1p, w2p, b2p, *, out_size):
    """Fused forward.  Weights must already be padded via prepare_params()."""
    B, in_size = x.shape
    Op = w2p.shape[1]

    # Only per-call prep: pad batch to a sublane multiple (fused under jit).
    Bp = _round_up(B, _SUBLANE)
    xp = x if Bp == B else jnp.zeros((Bp, in_size), x.dtype).at[:B].set(x)

    vmem = pltpu.MemorySpace.VMEM
    out_padded = pl.pallas_call(
        linear_net_kernel,
        out_shape=jax.ShapeDtypeStruct((Bp, Op), x.dtype),
        in_specs=[
            pl.BlockSpec(memory_space=vmem),  # x
            pl.BlockSpec(memory_space=vmem),  # w1
            pl.BlockSpec(memory_space=vmem),  # b1
            pl.BlockSpec(memory_space=vmem),  # w2
            pl.BlockSpec(memory_space=vmem),  # b2
        ],
        out_specs=pl.BlockSpec(memory_space=vmem),
    )(xp, w1p, b1p, w2p, b2p)

    return out_padded[:B, :out_size]


def init_params(key, in_size, hidden_size, out_size):
    # Deterministic init mimicking torch's default (uniform +-1/sqrt(fan_in)).
    # Weights stored (in, hidden)/(hidden, out), i.e. transposed vs torch's
    # (out, in), so the kernel does plain x @ W on the MXU.
    k1, k2, k3, k4 = jax.random.split(key, 4)
    lim1 = 1.0 / jnp.sqrt(in_size)
    lim2 = 1.0 / jnp.sqrt(hidden_size)
    w1 = jax.random.uniform(k1, (in_size, hidden_size), jnp.float32, -lim1, lim1)
    b1 = jax.random.uniform(k2, (1, hidden_size), jnp.float32, -lim1, lim1)
    w2 = jax.random.uniform(k3, (hidden_size, out_size), jnp.float32, -lim2, lim2)
    b2 = jax.random.uniform(k4, (1, out_size), jnp.float32, -lim2, lim2)
    return w1, b1, w2, b2


if __name__ == "__main__":
    in_size, hidden_size, out_size = 32, 64, 16
    batch = 8

    key = jax.random.PRNGKey(0)
    kx, kp = jax.random.split(key)
    x = jax.random.normal(kx, (batch, in_size), jnp.float32)
    w1, b1, w2, b2 = init_params(kp, in_size, hidden_size, out_size)

    # One-time weight padding (outside the hot path).
    w1p, b1p, w2p, b2p = prepare_params(w1, b1, w2, b2)

    out = linear_net(x, w1p, b1p, w2p, b2p, out_size=out_size)
    jax.block_until_ready(out)

    # Pure-JAX reference check.
    ref = jnp.maximum(jnp.maximum(x @ w1 + b1, 0.0) @ w2 + b2, 0.0)
    assert out.shape == (batch, out_size)
    assert jnp.allclose(out, ref, atol=1e-5, rtol=1e-5)

    print("KERNEL_OK")
</pallas_src>

<mosaic_0001>
module attributes {stable_mosaic.version = 11 : i64} {
  func.func @linear_net_kernel(%arg0: memref<8x32xf32, #tpu.memory_space<vmem>>, %arg1: memref<32x128xf32, #tpu.memory_space<vmem>>, %arg2: memref<1x128xf32, #tpu.memory_space<vmem>>, %arg3: memref<128x128xf32, #tpu.memory_space<vmem>>, %arg4: memref<1x128xf32, #tpu.memory_space<vmem>>, %arg5: memref<8x128xf32, #tpu.memory_space<vmem>>) attributes {dimension_semantics = [], scalar_prefetch = 0 : i64, scratch_operands = 0 : i64, tpu.core_type = #tpu.core_type<tc>} {
    %c0 = arith.constant 0 : index
    %c0_0 = arith.constant 0 : index
    %0 = vector.load %arg0[%c0, %c0_0] : memref<8x32xf32, #tpu.memory_space<vmem>>, vector<8x32xf32>
    %c0_1 = arith.constant 0 : index
    %c0_2 = arith.constant 0 : index
    %1 = vector.load %arg1[%c0_1, %c0_2] : memref<32x128xf32, #tpu.memory_space<vmem>>, vector<32x128xf32>
    %cst = arith.constant dense<0.000000e+00> : vector<8x128xf32>
    %2 = tpu.matmul %0, %1, %cst {dimension_numbers = #tpu.dot_dimension_numbers<[1], [0], [0], [1], [0, 0, 1, 1], [], []>} : vector<8x32xf32>, vector<32x128xf32>, vector<8x128xf32> -> vector<8x128xf32>
    %c0_3 = arith.constant 0 : index
    %c0_4 = arith.constant 0 : index
    %3 = vector.load %arg2[%c0_3, %c0_4] : memref<1x128xf32, #tpu.memory_space<vmem>>, vector<1x128xf32>
    %4 = vector.broadcast %3 : vector<1x128xf32> to vector<8x128xf32>
    %5 = arith.addf %2, %4 : vector<8x128xf32>
    %cst_5 = arith.constant 0.000000e+00 : f32
    %6 = vector.broadcast %cst_5 : f32 to vector<8x128xf32>
    %7 = arith.maximumf %5, %6 : vector<8x128xf32>
    %c0_6 = arith.constant 0 : index
    %c0_7 = arith.constant 0 : index
    %8 = vector.load %arg3[%c0_6, %c0_7] : memref<128x128xf32, #tpu.memory_space<vmem>>, vector<128x128xf32>
    %cst_8 = arith.constant dense<0.000000e+00> : vector<8x128xf32>
    %9 = tpu.matmul %7, %8, %cst_8 {dimension_numbers = #tpu.dot_dimension_numbers<[1], [0], [0], [1], [0, 0, 1, 1], [], []>} : vector<8x128xf32>, vector<128x128xf32>, vector<8x128xf32> -> vector<8x128xf32>
    %c0_9 = arith.constant 0 : index
    %c0_10 = arith.constant 0 : index
    %10 = vector.load %arg4[%c0_9, %c0_10] : memref<1x128xf32, #tpu.memory_space<vmem>>, vector<1x128xf32>
    %11 = vector.broadcast %10 : vector<1x128xf32> to vector<8x128xf32>
    %12 = arith.addf %9, %11 : vector<8x128xf32>
    %cst_11 = arith.constant 0.000000e+00 : f32
    %13 = vector.broadcast %cst_11 : f32 to vector<8x128xf32>
    %14 = arith.maximumf %12, %13 : vector<8x128xf32>
    %c0_12 = arith.constant 0 : index
    %c0_13 = arith.constant 0 : index
    %15 = vector.load %arg5[%c0_12, %c0_13] : memref<8x128xf32, #tpu.memory_space<vmem>>, vector<8x128xf32>
    tpu.vector_store %arg5[%c0_12, %c0_13], %14 {strides = array<i32>} : memref<8x128xf32, #tpu.memory_space<vmem>>, vector<8x128xf32>,
    return
  }
}

</mosaic_0001>

<llo_original>
// kernel: linear_net.1
$region0: #{linear_net.1}
  #allocation0 [shape = 'u32[]', space=smem, size = 0x4, offset = 0x4, fixed_abs, tag = 'smem constant byte address 0x4 - core index']
  #allocation1 [shape = 'u32[72,128]{1,0:T(1,128)}', space=vmem, size = 0x9000, scoped, tag = 'internal scratch']
  %s0 = inlined_call_operand.hbm [shape: f32[8,32], index: 0, kind: input, shape index: {}]
  %s1 = inlined_call_operand.hbm [shape: f32[32,128], index: 1, kind: input, shape index: {}]
  %s2 = inlined_call_operand.vmem [shape: f32[1,128], index: 2, kind: input, shape index: {}]
  %s3 = inlined_call_operand.hbm [shape: f32[128,128], index: 3, kind: input, shape index: {}]
  %s4 = inlined_call_operand.vmem [shape: f32[1,128], index: 4, kind: input, shape index: {}]
  %s5 = inlined_call_operand.hbm [shape: f32[8,128], index: 5, kind: output, shape index: {}]
  %s6 = sld [smem:[#allocation0]]
  $region42: #{linear_net.1} parent=0
    _
  %s8 = ssub.s32 1, %s6
  %s9 = scalar_select 0, %s8, %s6
  $region1: #{linear_net.1} parent=0
    #allocation2 [shape = 'u8[4096]{0}', space=vmem, size = 0x1000, scoped, tag = 'input window, operand 0, single buffered']
    #allocation3 [shape = 's32[1]{0}', space=sflag, size = 0x4, scoped, tag = 'scoped memory for linear_net.1']
    #allocation4 [shape = 's32[1]{0}', space=sflag, size = 0x4, scoped, tag = 'scoped memory for linear_net.1']
    #allocation5 [shape = 'u8[16384]{0}', space=vmem, size = 0x4000, scoped, tag = 'input window, operand 1, single buffered']
    #allocation6 [shape = 's32[1]{0}', space=sflag, size = 0x4, scoped, tag = 'scoped memory for linear_net.1']
    #allocation7 [shape = 'u8[65536]{0}', space=vmem, size = 0x10000, scoped, tag = 'input window, operand 3, single buffered']
    #allocation8 [shape = 'u8[4096]{0}', space=vmem, size = 0x1000, scoped, tag = 'output window, operand 0, single buffered']
    %10 = vsyncpa [#allocation3], 0
    %11 = vsyncpa [#allocation6], 0
    %12 = vsyncpa [#allocation4], 0
    // Predicated region
    $region2: #{linear_net.1} parent=1 // pred_check
      _
    $region3: #{linear_net.1} parent=1 // pred_check_branch
      %14 = sbr.rel (0) target = $region5
    $region4: #{linear_net.1} parent=1 // pred_region
      %16 = vsyncadd [#allocation3], 0
      %s18 = sshll.u32 %s0, 4
      %s19 = int_to_ptr.hbm [resolvable:$true] %s18
      %s20 = sshll.u32 [#allocation2], 4
      %s21 = int_to_ptr.vmem [resolvable:$true] %s20
      %23 = dma.hbm_to_vmem [thread:$0]  %s19, 128, %s21, [#allocation3]
    $region5: #{linear_net.1} parent=1 // pred_fallthru
      _
    // Predicated region
    $region6: #{linear_net.1} parent=1 // pred_check
      _
    $region7: #{linear_net.1} parent=1 // pred_check_branch
      %25 = sbr.rel (0) target = $region9
    $region8: #{linear_net.1} parent=1 // pred_region
      %27 = vsyncadd [#allocation6], 0
      %s28 = sshll.u32 %s1, 4
      %s29 = int_to_ptr.hbm [resolvable:$true] %s28
      %s30 = sshll.u32 [#allocation5], 4
      %s31 = int_to_ptr.vmem [resolvable:$true] %s30
      %36 = dma.hbm_to_vmem [thread:$0]  %s29, 512, %s31, [#allocation6], 128, 128, 8
    $region9: #{linear_net.1} parent=1 // pred_fallthru
      _
    // Predicated region
    $region10: #{linear_net.1} parent=1 // pred_check
      _
    $region11: #{linear_net.1} parent=1 // pred_check_branch
      %38 = sbr.rel (0) target = $region13
    $region12: #{linear_net.1} parent=1 // pred_region
      _
    $region13: #{linear_net.1} parent=1 // pred_fallthru
      _
    // Predicated region
    $region14: #{linear_net.1} parent=1 // pred_check
      _
    $region15: #{linear_net.1} parent=1 // pred_check_branch
      %40 = sbr.rel (0) target = $region17
    $region16: #{linear_net.1} parent=1 // pred_region
      %42 = vsyncadd [#allocation6], 0
      %s43 = sshll.u32 %s3, 4
      %s44 = int_to_ptr.hbm [resolvable:$true] %s43
      %s45 = sshll.u32 [#allocation7], 4
      %s46 = int_to_ptr.vmem [resolvable:$true] %s45
      %51 = dma.hbm_to_vmem [thread:$0]  %s44, 2048, %s46, [#allocation6], 128, 128, 8
    $region17: #{linear_net.1} parent=1 // pred_fallthru
      _
    // Predicated region
    $region18: #{linear_net.1} parent=1 // pred_check
      _
    $region19: #{linear_net.1} parent=1 // pred_check_branch
      %53 = sbr.rel (0) target = $region21
    $region20: #{linear_net.1} parent=1 // pred_region
      _
    $region21: #{linear_net.1} parent=1 // pred_fallthru
      _
    // Predicated region
    $region22: #{linear_net.1} parent=1 // pred_check
      _
    $region23: #{linear_net.1} parent=1 // pred_check_branch
      %55 = sbr.rel (0) target = $region25
    $region24: #{linear_net.1} parent=1 // pred_region
      %57 = dma.done [#allocation3], 128
    $region25: #{linear_net.1} parent=1 // pred_fallthru
      _
    // Predicated region
    $region26: #{linear_net.1} parent=1 // pred_check
      _
    $region27: #{linear_net.1} parent=1 // pred_check_branch
      %59 = sbr.rel (0) target = $region29
    $region28: #{linear_net.1} parent=1 // pred_region
      %61 = dma.done [#allocation6], 512
    $region29: #{linear_net.1} parent=1 // pred_fallthru
      _
    // Predicated region
    $region30: #{linear_net.1} parent=1 // pred_check
      _
    $region31: #{linear_net.1} parent=1 // pred_check_branch
      %63 = sbr.rel (0) target = $region33
    $region32: #{linear_net.1} parent=1 // pred_region
      %65 = dma.done [#allocation6], 2048
    $region33: #{linear_net.1} parent=1 // pred_fallthru
      _
    %v66 = vld [vmem:[#allocation2] sm:$0xff]
    %v67 = vld [vmem:[#allocation5] sm:$0xff]
    %v68 = vld [vmem:[#allocation5 + $0x8] sm:$0xff]
    %v69 = vld [vmem:[#allocation5 + $0x10] sm:$0xff]
    %v70 = vld [vmem:[#allocation5 + $0x18] sm:$0xff]
    %v71 = vld [vmem:[%s2] sm:$0x1]
    %v73 = vperm.slane %v71, 0
    %vm75 = vcmask 261120
    %v77 = vsel %vm75, %v66, 0
    %79 = vmatpush.msra.mxu0 0.0
    %80 = vmatpush.msra.mxu0 0.0
    %81 = vmatpush.msra.mxu0 0.0
    %82 = vmatpush.msra.mxu0 0.0
    %83 = vmatpush.msra.mxu0 0.0
    %84 = vmatpush.msra.mxu0 0.0
    %85 = vmatpush.msra.mxu0 0.0
    %86 = vmatpush.msra.mxu0 0.0
    %87 = vmatpush.msra.mxu0 0.0
    %88 = vmatpush.msra.mxu0 0.0
    %89 = vmatpush.msra.mxu0 0.0
    %90 = vmatpush.msra.mxu0 0.0
    %91 = vmatpush.msra.mxu0 %v70
    %92 = vmatpush.msra.mxu0 %v69
    %93 = vmatpush.msra.mxu0 %v68
    %94 = vmatpush.msra.mxu0 %v67
    %95 = vmatmul.f32.gmra.mxu0 %v77
    %v96 = vpop.f32.mrf.mxu0
    %v97 = vadd.f32 %v73, %v96
    %98 = vdwg.mxu0
    %v99 = vmax.f32 %v97, 0.0
    %v100 = vld [vmem:[#allocation7] sm:$0xff]
    %v101 = vld [vmem:[#allocation7 + $0x8] sm:$0xff]
    %v102 = vld [vmem:[#allocation7 + $0x10] sm:$0xff]
    %v103 = vld [vmem:[#allocation7 + $0x18] sm:$0xff]
    %v104 = vld [vmem:[#allocation7 + $0x20] sm:$0xff]
    %v105 = vld [vmem:[#allocation7 + $0x28] sm:$0xff]
    %v106 = vld [vmem:[#allocation7 + $0x30] sm:$0xff]
    %v107 = vld [vmem:[#allocation7 + $0x38] sm:$0xff]
    %v108 = vld [vmem:[#allocation7 + $0x40] sm:$0xff]
    %v109 = vld [vmem:[#allocation7 + $0x48] sm:$0xff]
    %v110 = vld [vmem:[#allocation7 + $0x50] sm:$0xff]
    %v111 = vld [vmem:[#allocation7 + $0x58] sm:$0xff]
    %v112 = vld [vmem:[#allocation7 + $0x60] sm:$0xff]
    %v113 = vld [vmem:[#allocation7 + $0x68] sm:$0xff]
    %v114 = vld [vmem:[#allocation7 + $0x70] sm:$0xff]
    %v115 = vld [vmem:[#allocation7 + $0x78] sm:$0xff]
    %v116 = vld [vmem:[%s4] sm:$0x1]
    %v118 = vperm.slane %v116, 0
    %120 = vmatpush.msra.mxu0 %v115
    %121 = vmatpush.msra.mxu0 %v114
    %122 = vmatpush.msra.mxu0 %v113
    %123 = vmatpush.msra.mxu0 %v112
    %124 = vmatpush.msra.mxu0 %v111
    %125 = vmatpush.msra.mxu0 %v110
    %126 = vmatpush.msra.mxu0 %v109
    %127 = vmatpush.msra.mxu0 %v108
    %128 = vmatpush.msra.mxu0 %v107
    %129 = vmatpush.msra.mxu0 %v106
    %130 = vmatpush.msra.mxu0 %v105
    %131 = vmatpush.msra.mxu0 %v104
    %132 = vmatpush.msra.mxu0 %v103
    %133 = vmatpush.msra.mxu0 %v102
    %134 = vmatpush.msra.mxu0 %v101
    %135 = vmatpush.msra.mxu0 %v100
    %136 = vmatmul.f32.gmra.mxu0 %v99
    %v137 = vpop.f32.mrf.mxu0
    %v138 = vadd.f32 %v118, %v137
    %139 = vdwg.mxu0
    %v140 = vmax.f32 %v138, 0.0
    %141 = vst [vmem:[#allocation8] sm:$0xff] %v140
    // Predicated region
    $region34: #{linear_net.1} parent=1 // pred_check
      _
    $region35: #{linear_net.1} parent=1 // pred_check_branch
      %143 = sbr.rel (0) target = $region37
    $region36: #{linear_net.1} parent=1 // pred_region
      %145 = vsyncadd [#allocation4], 0
      %s147 = sshll.u32 [#allocation8], 4
      %s148 = int_to_ptr.vmem [resolvable:$true] %s147
      %s149 = sshll.u32 %s5, 4
      %s150 = int_to_ptr.hbm [resolvable:$true] %s149
      %152 = dma.vmem_to_hbm [thread:$0]  %s148, 128, %s150, [#allocation4]
    $region37: #{linear_net.1} parent=1 // pred_fallthru
      _
    // Predicated region
    $region38: #{linear_net.1} parent=1 // pred_check
      _
    $region39: #{linear_net.1} parent=1 // pred_check_branch
      %154 = sbr.rel (0) target = $region41
    $region40: #{linear_net.1} parent=1 // pred_region
      %156 = dma.done [#allocation4], 128
    $region41: #{linear_net.1} parent=1 // pred_fallthru
      _
    %157 = vsyncpa [#allocation3], 1
    %158 = vsyncpa [#allocation6], 1
    %159 = vsyncpa [#allocation4], 1

</llo_original>
